<compile_context>
chip_gen: v7x
topology: tpu7x:2x2x1
jax: 0.10.0
libtpu: 0.0.40
codegen_flags: <defaults>
</compile_context>

<pallas_src>
import jax
import jax.numpy as jnp
from jax.experimental import pallas as pl
from jax.experimental.pallas import tpu as pltpu

LATENT_DIM = 32
HIDDEN1 = 128
HIDDEN2 = 256
OUTPUT_DIM = 16


def _round_up(x, m):
    return (x + m - 1) // m * m


def _generator_kernel(z_ref, w1_ref, b1_ref, w2_ref, b2_ref, w3_ref, b3_ref,
                      o_ref):
    """Fused 3-layer MLP: (matmul + bias + ReLU) x2 then matmul + bias + Tanh.

    Matmul inputs may be bf16; accumulation and all elementwise math are f32.
    """
    cdt = w1_ref.dtype  # compute dtype for MXU inputs (bf16 or f32)
    z = z_ref[...]

    h1 = jnp.dot(z, w1_ref[...], preferred_element_type=jnp.float32)
    h1 = jnp.maximum(h1 + b1_ref[...], 0.0).astype(cdt)

    h2 = jnp.dot(h1, w2_ref[...], preferred_element_type=jnp.float32)
    h2 = jnp.maximum(h2 + b2_ref[...], 0.0).astype(cdt)

    h3 = jnp.dot(h2, w3_ref[...], preferred_element_type=jnp.float32)
    o_ref[...] = jnp.tanh(h3 + b3_ref[...]).astype(o_ref.dtype)


def generator_forward(z, params, *, block_b=512, compute_dtype=jnp.bfloat16):
    """Run the fused generator MLP as a single Pallas kernel.

    z: (B, latent_dim) float32
    params: dict with w1 (latent,128), b1 (1,128), w2 (128,256), b2 (1,256),
            w3 (256,out), b3 (1,out)  -- weights pre-transposed vs. PyTorch.
    """
    w1 = params["w1"].astype(compute_dtype)
    w2 = params["w2"].astype(compute_dtype)
    w3 = params["w3"].astype(compute_dtype)
    # Biases stay f32: they are added to the f32 MXU accumulator.
    b1 = params["b1"].astype(jnp.float32)
    b2 = params["b2"].astype(jnp.float32)
    b3 = params["b3"].astype(jnp.float32)

    B, latent_dim = z.shape
    out_dim = w3.shape[1]
    out_dtype = z.dtype

    # ---- Pick the effective batch tile -------------------------------------
    blk = max(8, min(block_b, _round_up(B, 8)))
    blk = _round_up(blk, 8)
    grid_len = pl.cdiv(B, blk)
    # v7x has 2 TensorCores; keep >= 2 parallel grid steps whenever the batch
    # can be split, so dimension_semantics=("parallel",) can use both cores.
    if grid_len == 1 and B > 8:
        blk = _round_up(pl.cdiv(B, 2), 8)
        grid_len = pl.cdiv(B, blk)

    # Pad the batch to a whole number of tiles instead of asserting.
    b_padded = blk * grid_len
    if b_padded != B:
        z = jnp.pad(z, ((0, b_padded - B), (0, 0)))
    z = z.astype(compute_dtype)

    bcast = lambda arr: pl.BlockSpec(arr.shape, lambda i: (0, 0))

    out = pl.pallas_call(
        _generator_kernel,
        out_shape=jax.ShapeDtypeStruct((b_padded, out_dim), out_dtype),
        grid_spec=pl.GridSpec(
            grid=(grid_len,),
            in_specs=[
                pl.BlockSpec((blk, latent_dim), lambda i: (i, 0)),  # z tile
                bcast(w1), bcast(b1),
                bcast(w2), bcast(b2),
                bcast(w3), bcast(b3),
            ],
            out_specs=pl.BlockSpec((blk, out_dim), lambda i: (i, 0)),
        ),
        compiler_params=pltpu.CompilerParams(
            dimension_semantics=("parallel",)),
    )(z, w1, b1, w2, b2, w3, b3)

    return out[:B] if b_padded != B else out


def init_params(key, latent_dim, output_dim):
    """Deterministic synthetic parameters (shapes match the PyTorch module)."""
    ks = jax.random.split(key, 6)
    scale = lambda fan_in: 1.0 / jnp.sqrt(fan_in)
    w1 = jax.random.uniform(ks[0], (latent_dim, HIDDEN1), jnp.float32,
                            -scale(latent_dim), scale(latent_dim))
    b1 = jax.random.uniform(ks[1], (1, HIDDEN1), jnp.float32,
                            -scale(latent_dim), scale(latent_dim))
    w2 = jax.random.uniform(ks[2], (HIDDEN1, HIDDEN2), jnp.float32,
                            -scale(HIDDEN1), scale(HIDDEN1))
    b2 = jax.random.uniform(ks[3], (1, HIDDEN2), jnp.float32,
                            -scale(HIDDEN1), scale(HIDDEN1))
    w3 = jax.random.uniform(ks[4], (HIDDEN2, output_dim), jnp.float32,
                            -scale(HIDDEN2), scale(HIDDEN2))
    b3 = jax.random.uniform(ks[5], (1, output_dim), jnp.float32,
                            -scale(HIDDEN2), scale(HIDDEN2))
    return dict(w1=w1, b1=b1, w2=w2, b2=b2, w3=w3, b3=b3)


def _reference_forward(z, p):
    h1 = jnp.maximum(z @ p["w1"] + p["b1"], 0.0)
    h2 = jnp.maximum(h1 @ p["w2"] + p["b2"], 0.0)
    return jnp.tanh(h2 @ p["w3"] + p["b3"])


if __name__ == "__main__":
    key = jax.random.PRNGKey(0)
    k_param, k_z = jax.random.split(key)

    # Small demo shapes; batch=24 is deliberately NOT a multiple of the tile so
    # the padding + 2-grid-step (v7x megacore) path is exercised.
    batch = 24
    params = init_params(k_param, LATENT_DIM, OUTPUT_DIM)
    z = jax.random.normal(k_z, (batch, LATENT_DIM), dtype=jnp.float32)

    ref = _reference_forward(z, params)

    # Default path: bf16 MXU inputs, f32 accumulate/elementwise.
    out_bf16 = jax.block_until_ready(generator_forward(z, params))
    assert out_bf16.shape == (batch, OUTPUT_DIM)
    assert jnp.allclose(out_bf16, ref, atol=5e-2, rtol=5e-2), (
        jnp.max(jnp.abs(out_bf16 - ref)))

    # Full-precision path for a tight numerical check.
    out_f32 = jax.block_until_ready(
        generator_forward(z, params, compute_dtype=jnp.float32))
    assert jnp.allclose(out_f32, ref, atol=1e-5, rtol=1e-5), (
        jnp.max(jnp.abs(out_f32 - ref)))

    print("KERNEL_OK")
</pallas_src>

<mosaic_0001>
module attributes {stable_mosaic.version = 11 : i64} {
  func.func @_generator_kernel(%arg0: i32, %arg1: memref<16x32xbf16, #tpu.memory_space<vmem>>, %arg2: memref<32x128xbf16, #tpu.memory_space<vmem>>, %arg3: memref<1x128xf32, #tpu.memory_space<vmem>>, %arg4: memref<128x256xbf16, #tpu.memory_space<vmem>>, %arg5: memref<1x256xf32, #tpu.memory_space<vmem>>, %arg6: memref<256x16xbf16, #tpu.memory_space<vmem>>, %arg7: memref<1x16xf32, #tpu.memory_space<vmem>>, %arg8: memref<16x16xf32, #tpu.memory_space<vmem>>) attributes {dimension_semantics = [#tpu.dimension_semantics<parallel>], iteration_bounds = array<i64: 2>, scalar_prefetch = 0 : i64, scratch_operands = 0 : i64, tpu.core_type = #tpu.core_type<tc>, window_params = [{transform_indices = @transform_0, window_bounds = array<i64: 16, 32>}, {pipeline_mode = #tpu.pipeline_mode<synchronous>, transform_indices = @transform_1, window_bounds = array<i64: 32, 128>}, {pipeline_mode = #tpu.pipeline_mode<synchronous>, transform_indices = @transform_2, window_bounds = array<i64: 1, 128>}, {pipeline_mode = #tpu.pipeline_mode<synchronous>, transform_indices = @transform_3, window_bounds = array<i64: 128, 256>}, {pipeline_mode = #tpu.pipeline_mode<synchronous>, transform_indices = @transform_4, window_bounds = array<i64: 1, 256>}, {pipeline_mode = #tpu.pipeline_mode<synchronous>, transform_indices = @transform_5, window_bounds = array<i64: 256, 16>}, {pipeline_mode = #tpu.pipeline_mode<synchronous>, transform_indices = @transform_6, window_bounds = array<i64: 1, 16>}, {transform_indices = @transform_7, window_bounds = array<i64: 16, 16>}]} {
    %c0 = arith.constant 0 : index
    %c0_0 = arith.constant 0 : index
    %0 = vector.load %arg1[%c0, %c0_0] : memref<16x32xbf16, #tpu.memory_space<vmem>>, vector<16x32xbf16>
    %c0_1 = arith.constant 0 : index
    %c0_2 = arith.constant 0 : index
    %1 = vector.load %arg2[%c0_1, %c0_2] : memref<32x128xbf16, #tpu.memory_space<vmem>>, vector<32x128xbf16>
    %cst = arith.constant dense<0.000000e+00> : vector<16x128xf32>
    %2 = tpu.matmul %0, %1, %cst {dimension_numbers = #tpu.dot_dimension_numbers<[1], [0], [0], [1], [0, 0, 1, 1], [], []>} : vector<16x32xbf16>, vector<32x128xbf16>, vector<16x128xf32> -> vector<16x128xf32>
    %c0_3 = arith.constant 0 : index
    %c0_4 = arith.constant 0 : index
    %3 = vector.load %arg3[%c0_3, %c0_4] : memref<1x128xf32, #tpu.memory_space<vmem>>, vector<1x128xf32>
    %4 = vector.broadcast %3 : vector<1x128xf32> to vector<16x128xf32>
    %5 = arith.addf %2, %4 : vector<16x128xf32>
    %cst_5 = arith.constant 0.000000e+00 : f32
    %6 = vector.broadcast %cst_5 : f32 to vector<16x128xf32>
    %7 = arith.maximumf %5, %6 : vector<16x128xf32>
    %8 = arith.truncf %7 : vector<16x128xf32> to vector<16x128xbf16>
    %c0_6 = arith.constant 0 : index
    %c0_7 = arith.constant 0 : index
    %9 = vector.load %arg4[%c0_6, %c0_7] : memref<128x256xbf16, #tpu.memory_space<vmem>>, vector<128x256xbf16>
    %cst_8 = arith.constant dense<0.000000e+00> : vector<16x256xf32>
    %10 = tpu.matmul %8, %9, %cst_8 {dimension_numbers = #tpu.dot_dimension_numbers<[1], [0], [0], [1], [0, 0, 1, 1], [], []>} : vector<16x128xbf16>, vector<128x256xbf16>, vector<16x256xf32> -> vector<16x256xf32>
    %c0_9 = arith.constant 0 : index
    %c0_10 = arith.constant 0 : index
    %11 = vector.load %arg5[%c0_9, %c0_10] : memref<1x256xf32, #tpu.memory_space<vmem>>, vector<1x256xf32>
    %12 = vector.broadcast %11 : vector<1x256xf32> to vector<16x256xf32>
    %13 = arith.addf %10, %12 : vector<16x256xf32>
    %cst_11 = arith.constant 0.000000e+00 : f32
    %14 = vector.broadcast %cst_11 : f32 to vector<16x256xf32>
    %15 = arith.maximumf %13, %14 : vector<16x256xf32>
    %16 = arith.truncf %15 : vector<16x256xf32> to vector<16x256xbf16>
    %c0_12 = arith.constant 0 : index
    %c0_13 = arith.constant 0 : index
    %17 = vector.load %arg6[%c0_12, %c0_13] : memref<256x16xbf16, #tpu.memory_space<vmem>>, vector<256x16xbf16>
    %cst_14 = arith.constant dense<0.000000e+00> : vector<16x16xf32>
    %18 = tpu.matmul %16, %17, %cst_14 {dimension_numbers = #tpu.dot_dimension_numbers<[1], [0], [0], [1], [0, 0, 1, 1], [], []>} : vector<16x256xbf16>, vector<256x16xbf16>, vector<16x16xf32> -> vector<16x16xf32>
    %c0_15 = arith.constant 0 : index
    %c0_16 = arith.constant 0 : index
    %19 = vector.load %arg7[%c0_15, %c0_16] : memref<1x16xf32, #tpu.memory_space<vmem>>, vector<1x16xf32>
    %20 = vector.broadcast %19 : vector<1x16xf32> to vector<16x16xf32>
    %21 = arith.addf %18, %20 : vector<16x16xf32>
    %22 = math.tanh %21 : vector<16x16xf32>
    %c0_17 = arith.constant 0 : index
    %c0_18 = arith.constant 0 : index
    %23 = vector.load %arg8[%c0_17, %c0_18] : memref<16x16xf32, #tpu.memory_space<vmem>>, vector<16x16xf32>
    tpu.vector_store %arg8[%c0_17, %c0_18], %22 {strides = array<i32>} : memref<16x16xf32, #tpu.memory_space<vmem>>, vector<16x16xf32>,
    return
  }
  func.func @transform_0(%arg0: i32) -> (i32, i32) {
    %c0_i32 = arith.constant 0 : i32
    %c0_i32_0 = arith.constant 0 : i32
    return %arg0, %c0_i32 : i32, i32
  }
  func.func @transform_1(%arg0: i32) -> (i32, i32) {
    %c0_i32 = arith.constant 0 : i32
    %c0_i32_0 = arith.constant 0 : i32
    %c0_i32_1 = arith.constant 0 : i32
    return %c0_i32, %c0_i32_0 : i32, i32
  }
  func.func @transform_2(%arg0: i32) -> (i32, i32) {
    %c0_i32 = arith.constant 0 : i32
    %c0_i32_0 = arith.constant 0 : i32
    %c0_i32_1 = arith.constant 0 : i32
    return %c0_i32, %c0_i32_0 : i32, i32
  }
  func.func @transform_3(%arg0: i32) -> (i32, i32) {
    %c0_i32 = arith.constant 0 : i32
    %c0_i32_0 = arith.constant 0 : i32
    %c0_i32_1 = arith.constant 0 : i32
    return %c0_i32, %c0_i32_0 : i32, i32
  }
  func.func @transform_4(%arg0: i32) -> (i32, i32) {
    %c0_i32 = arith.constant 0 : i32
    %c0_i32_0 = arith.constant 0 : i32
    %c0_i32_1 = arith.constant 0 : i32
    return %c0_i32, %c0_i32_0 : i32, i32
  }
  func.func @transform_5(%arg0: i32) -> (i32, i32) {
    %c0_i32 = arith.constant 0 : i32
    %c0_i32_0 = arith.constant 0 : i32
    %c0_i32_1 = arith.constant 0 : i32
    return %c0_i32, %c0_i32_0 : i32, i32
  }
  func.func @transform_6(%arg0: i32) -> (i32, i32) {
    %c0_i32 = arith.constant 0 : i32
    %c0_i32_0 = arith.constant 0 : i32
    %c0_i32_1 = arith.constant 0 : i32
    return %c0_i32, %c0_i32_0 : i32, i32
  }
  func.func @transform_7(%arg0: i32) -> (i32, i32) {
    %c0_i32 = arith.constant 0 : i32
    %c0_i32_0 = arith.constant 0 : i32
    return %arg0, %c0_i32 : i32, i32
  }
}

</mosaic_0001>

<llo_original>
// kernel: tpu_custom_call.1
$region0: #{tpu_custom_call.1}
  #allocation0 [shape = 'u32[]', space=smem, size = 0x4, offset = 0x4, fixed_abs, tag = 'smem constant byte address 0x4 - core index']
  #allocation1 [shape = 'u32[144,128]{1,0:T(1,128)}', space=vmem, size = 0x12000, scoped, tag = 'internal scratch']
  %s0 = inlined_call_operand.vmem [shape: bf16[32,32], index: 0, kind: input, shape index: {}]
  %s1 = inlined_call_operand.hbm [shape: bf16[32,128], index: 1, kind: input, shape index: {}]
  %s2 = inlined_call_operand.hbm [shape: f32[1,128], index: 2, kind: input, shape index: {}]
  %s3 = inlined_call_operand.vmem [shape: bf16[128,256], index: 3, kind: input, shape index: {}]
  %s4 = inlined_call_operand.vmem [shape: f32[1,256], index: 4, kind: input, shape index: {}]
  %s5 = inlined_call_operand.vmem [shape: bf16[256,16], index: 5, kind: input, shape index: {}]
  %s6 = inlined_call_operand.vmem [shape: f32[1,16], index: 6, kind: input, shape index: {}]
  %s7 = inlined_call_operand.vmem [shape: f32[32,16], index: 7, kind: output, shape index: {}]
  %s8 = sld [smem:[#allocation0]]
  $region69: #{tpu_custom_call.1} parent=0
    _
  %s10 = ssub.s32 1, %s8
  %s11 = scalar_select 0, %s10, %s8
  $region1: #{tpu_custom_call.1} parent=0
    #allocation2 [shape = 'u8[8192]{0}', space=vmem, size = 0x2000, scoped, tag = 'input window, operand 1, single buffered']
    #allocation3 [shape = 's32[2]{0}', space=sflag, size = 0x8, scoped, tag = 'scoped memory for tpu_custom_call.1']
    #allocation4 [shape = 'u8[512]{0}', space=vmem, size = 0x400, scoped, tag = 'input window, operand 2, single buffered']
    #allocation5 [shape = 's32[1]{0}', space=sflag, size = 0x4, scoped, tag = 'scoped memory for tpu_custom_call.1']
    %12 = vsyncpa [#allocation3], 0
    %13 = vsyncpa [#allocation5], 0
    loop: start=0, step=1, limit=4
    $region2: #{tpu_custom_call.1} parent=1 // loop_pre_header
      _
    $region3: #{tpu_custom_call.1} parent=1 // loop_header
      %s15 = sphi 0, %s19
      %p16 = scmp.ge.s32.totalorder %s15, 4
      %s25 = sphi 0, %s27
      %s28 = sphi 0, %s25
      %s29 = sphi 0, %s28
      %s45 = sphi 0, %s29
      %s49 = sphi 0, %s49
      %s51 = sphi 0, %s49
      %s52 = sphi 0, %s51
      %s66 = sphi 0, %s52
      %s70 = sphi 0, %s70
      %s72 = sphi 0, %s70
      %s73 = sphi 0, %s72
      %s87 = sphi 0, %s73
      %s91 = sphi 0, %s91
      %s93 = sphi 0, %s91
      %s94 = sphi 0, %s93
      %s108 = sphi 0, %s94
      %s112 = sphi 0, %s112
      %s114 = sphi 0, %s112
      %s115 = sphi 0, %s114
      %s129 = sphi 0, %s115
      %s133 = sphi 0, %s133
      %s135 = sphi 0, %s133
      %s136 = sphi 0, %s135
      %s150 = sphi 0, %s136
      %s154 = sphi 0, %s154
      %s156 = sphi 0, %s154
      %s157 = sphi 0, %s156
      %s171 = sphi 0, %s157
      %s177 = sphi 0, %s179
      %s180 = sphi 0, %s177
      %s181 = sphi 0, %s180
      %s197 = sphi 0, %s181
    $region4: #{tpu_custom_call.1} parent=1 // loop_header_branch
      %18 = sbr.rel (%p16) target = $region8
    $region5: #{tpu_custom_call.1} parent=1 // loop_body
      %s20 = ssub.s32 %s15, 1
      %s21 = ssub.s32 %s15, 2
      %s22 = sadd.s32 %s15, 1
      %s23 = ssub.s32 %s15, %s22
      %p24 = scmp.eq.s32.totalorder %s23, 0
      %s26 = sadd.s32 %s25, 1
      %s27 = scalar_select %p24, %s25, %s26
      %p30 = pneg %p24
      %p31 = scmp.eq.s32.totalorder %s15, 1
      %p32 = por %p30, %p31
      %p33 = scmp.ne.s32.totalorder %s25, %s28
      %p34 = scmp.eq.s32.totalorder %s15, 0
      %p35 = por %p33, %p34
      %p36 = scmp.ne.s32.totalorder %s25, %s28
      %p37 = scmp.eq.s32.totalorder %s20, 1
      %p38 = por %p36, %p37
      %p39 = scmp.ne.s32.totalorder %s28, %s29
      %p40 = scmp.eq.s32.totalorder %s20, 0
      %p41 = por %p39, %p40
      %p42 = scmp.ne.s32.totalorder %s28, %s29
      %p43 = scmp.eq.s32.totalorder %s21, 1
      %p44 = por %p42, %p43
      %p46 = scmp.ne.s32.totalorder %s29, %s45
      %p47 = scmp.eq.s32.totalorder %s21, 0
      %p48 = por %p46, %p47
      %s50 = sadd.s32 %s49, 1
      %p53 = scmp.eq.s32.totalorder %s15, 1
      %p54 = scmp.ne.s32.totalorder %s49, %s51
      %p55 = scmp.eq.s32.totalorder %s15, 0
      %p56 = por %p54, %p55
      %p57 = scmp.ne.s32.totalorder %s49, %s51
      %p58 = scmp.eq.s32.totalorder %s20, 1
      %p59 = por %p57, %p58
      %p60 = scmp.ne.s32.totalorder %s51, %s52
      %p61 = scmp.eq.s32.totalorder %s20, 0
      %p62 = por %p60, %p61
      %p63 = scmp.ne.s32.totalorder %s51, %s52
      %p64 = scmp.eq.s32.totalorder %s21, 1
      %p65 = por %p63, %p64
      %p67 = scmp.ne.s32.totalorder %s52, %s66
      %p68 = scmp.eq.s32.totalorder %s21, 0
      %p69 = por %p67, %p68
      %s71 = sadd.s32 %s70, 1
      %p74 = scmp.eq.s32.totalorder %s15, 1
      %p75 = scmp.ne.s32.totalorder %s70, %s72
      %p76 = scmp.eq.s32.totalorder %s15, 0
      %p77 = por %p75, %p76
      %p78 = scmp.ne.s32.totalorder %s70, %s72
      %p79 = scmp.eq.s32.totalorder %s20, 1
      %p80 = por %p78, %p79
      %p81 = scmp.ne.s32.totalorder %s72, %s73
      %p82 = scmp.eq.s32.totalorder %s20, 0
      %p83 = por %p81, %p82
      %p84 = scmp.ne.s32.totalorder %s72, %s73
      %p85 = scmp.eq.s32.totalorder %s21, 1
      %p86 = por %p84, %p85
      %p88 = scmp.ne.s32.totalorder %s73, %s87
      %p89 = scmp.eq.s32.totalorder %s21, 0
      %p90 = por %p88, %p89
      %s92 = sadd.s32 %s91, 1
      %p95 = scmp.eq.s32.totalorder %s15, 1
      %p96 = scmp.ne.s32.totalorder %s91, %s93
      %p97 = scmp.eq.s32.totalorder %s15, 0
      %p98 = por %p96, %p97
      %p99 = scmp.ne.s32.totalorder %s91, %s93
      %p100 = scmp.eq.s32.totalorder %s20, 1
      %p101 = por %p99, %p100
      %p102 = scmp.ne.s32.totalorder %s93, %s94
      %p103 = scmp.eq.s32.totalorder %s20, 0
      %p104 = por %p102, %p103
      %p105 = scmp.ne.s32.totalorder %s93, %s94
      %p106 = scmp.eq.s32.totalorder %s21, 1
      %p107 = por %p105, %p106
      %p109 = scmp.ne.s32.totalorder %s94, %s108
      %p110 = scmp.eq.s32.totalorder %s21, 0
      %p111 = por %p109, %p110
      %s113 = sadd.s32 %s112, 1
      %p116 = scmp.eq.s32.totalorder %s15, 1
      %p117 = scmp.ne.s32.totalorder %s112, %s114
      %p118 = scmp.eq.s32.totalorder %s15, 0
      %p119 = por %p117, %p118
      %p120 = scmp.ne.s32.totalorder %s112, %s114
      %p121 = scmp.eq.s32.totalorder %s20, 1
      %p122 = por %p120, %p121
      %p123 = scmp.ne.s32.totalorder %s114, %s115
      %p124 = scmp.eq.s32.totalorder %s20, 0
      %p125 = por %p123, %p124
      %p126 = scmp.ne.s32.totalorder %s114, %s115
      %p127 = scmp.eq.s32.totalorder %s21, 1
      %p128 = por %p126, %p127
      %p130 = scmp.ne.s32.totalorder %s115, %s129
      %p131 = scmp.eq.s32.totalorder %s21, 0
      %p132 = por %p130, %p131
      %s134 = sadd.s32 %s133, 1
      %p137 = scmp.eq.s32.totalorder %s15, 1
      %p138 = scmp.ne.s32.totalorder %s133, %s135
      %p139 = scmp.eq.s32.totalorder %s15, 0
      %p140 = por %p138, %p139
      %p141 = scmp.ne.s32.totalorder %s133, %s135
      %p142 = scmp.eq.s32.totalorder %s20, 1
      %p143 = por %p141, %p142
      %p144 = scmp.ne.s32.totalorder %s135, %s136
      %p145 = scmp.eq.s32.totalorder %s20, 0
      %p146 = por %p144, %p145
      %p147 = scmp.ne.s32.totalorder %s135, %s136
      %p148 = scmp.eq.s32.totalorder %s21, 1
      %p149 = por %p147, %p148
      %p151 = scmp.ne.s32.totalorder %s136, %s150
      %p152 = scmp.eq.s32.totalorder %s21, 0
      %p153 = por %p151, %p152
      %s155 = sadd.s32 %s154, 1
      %p158 = scmp.eq.s32.totalorder %s15, 1
      %p159 = scmp.ne.s32.totalorder %s154, %s156
      %p160 = scmp.eq.s32.totalorder %s15, 0
      %p161 = por %p159, %p160
      %p162 = scmp.ne.s32.totalorder %s154, %s156
      %p163 = scmp.eq.s32.totalorder %s20, 1
      %p164 = por %p162, %p163
      %p165 = scmp.ne.s32.totalorder %s156, %s157
      %p166 = scmp.eq.s32.totalorder %s20, 0
      %p167 = por %p165, %p166
      %p168 = scmp.ne.s32.totalorder %s156, %s157
      %p169 = scmp.eq.s32.totalorder %s21, 1
      %p170 = por %p168, %p169
      %p172 = scmp.ne.s32.totalorder %s157, %s171
      %p173 = scmp.eq.s32.totalorder %s21, 0
      %p174 = por %p172, %p173
      %s175 = ssub.s32 %s15, %s22
      %p176 = scmp.eq.s32.totalorder %s175, 0
      %s178 = sadd.s32 %s177, 1
      %s179 = scalar_select %p176, %s177, %s178
      %p182 = pneg %p176
      %p183 = scmp.eq.s32.totalorder %s15, 1
      %p184 = por %p182, %p183
      %p185 = scmp.ne.s32.totalorder %s177, %s180
      %p186 = scmp.eq.s32.totalorder %s15, 0
      %p187 = por %p185, %p186
      %p188 = scmp.ne.s32.totalorder %s177, %s180
      %p189 = scmp.eq.s32.totalorder %s20, 1
      %p190 = por %p188, %p189
      %p191 = scmp.ne.s32.totalorder %s180, %s181
      %p192 = scmp.eq.s32.totalorder %s20, 0
      %p193 = por %p191, %p192
      %p194 = scmp.ne.s32.totalorder %s180, %s181
      %p195 = scmp.eq.s32.totalorder %s21, 1
      %p196 = por %p194, %p195
      %p198 = scmp.ne.s32.totalorder %s181, %s197
      %p199 = scmp.eq.s32.totalorder %s21, 0
      %p200 = por %p198, %p199
      %p201 = scmp.le.s32.totalorder 1, %s15
      %p202 = scmp.lt.s32.totalorder %s15, 3
      %p203 = pnand %p201, %p202
      %p204 = pneg %p203
      // Predicated region
      $region9: #{tpu_custom_call.1} parent=5 // pred_check
        _
      $region10: #{tpu_custom_call.1} parent=5 // pred_check_branch
        %206 = sbr.rel (%p203) target = $region12
      $region11: #{tpu_custom_call.1} parent=5 // pred_region
        %s207 = ssub.s32 %s15, 1
        // Predicated region
        $region13: #{tpu_custom_call.1} parent=11 // pred_check
          %p208 = pneg %p62
        $region14: #{tpu_custom_call.1} parent=11 // pred_check_branch
          %210 = sbr.rel (%p208) target = $region16
        $region15: #{tpu_custom_call.1} parent=11 // pred_region
          %s212 = ssub.s32 256, 256
          %213 = vsyncadd [#allocation3], %s212
          %s214 = sshll.u32 [#allocation2], 4
          %s215 = int_to_ptr.vmem [resolvable:$true] %s214
          %220 = dma.hbm_to_vmem [thread:$0]  %s1, 256, %s215, [#allocation3], 64, 64, 4
        $region16: #{tpu_custom_call.1} parent=11 // pred_fallthru
          _
        // Predicated region
        $region17: #{tpu_custom_call.1} parent=11 // pred_check
          %p221 = pneg %p83
        $region18: #{tpu_custom_call.1} parent=11 // pred_check_branch
          %223 = sbr.rel (%p221) target = $region20
        $region19: #{tpu_custom_call.1} parent=11 // pred_region
          %s225 = ssub.s32 16, 16
          %226 = vsyncadd [#allocation5], %s225
          %s228 = sshll.u32 [#allocation4], 4
          %s229 = int_to_ptr.vmem [resolvable:$true] %s228
          %231 = dma.hbm_to_vmem [thread:$0]  %s2, 16, %s229, [#allocation5]
        $region20: #{tpu_custom_call.1} parent=11 // pred_fallthru
          _
        // Predicated region
        $region21: #{tpu_custom_call.1} parent=11 // pred_check
          %p232 = pneg %p104
        $region22: #{tpu_custom_call.1} parent=11 // pred_check_branch
          %234 = sbr.rel (%p232) target = $region24
        $region23: #{tpu_custom_call.1} parent=11 // pred_region
          _
        $region24: #{tpu_custom_call.1} parent=11 // pred_fallthru
          _
        // Predicated region
        $region25: #{tpu_custom_call.1} parent=11 // pred_check
          %p235 = pneg %p125
        $region26: #{tpu_custom_call.1} parent=11 // pred_check_branch
          %237 = sbr.rel (%p235) target = $region28
        $region27: #{tpu_custom_call.1} parent=11 // pred_region
          _
        $region28: #{tpu_custom_call.1} parent=11 // pred_fallthru
          _
        // Predicated region
        $region29: #{tpu_custom_call.1} parent=11 // pred_check
          %p238 = pneg %p146
        $region30: #{tpu_custom_call.1} parent=11 // pred_check_branch
          %240 = sbr.rel (%p238) target = $region32
        $region31: #{tpu_custom_call.1} parent=11 // pred_region
          _
        $region32: #{tpu_custom_call.1} parent=11 // pred_fallthru
          _
        // Predicated region
        $region33: #{tpu_custom_call.1} parent=11 // pred_check
          %p241 = pneg %p167
        $region34: #{tpu_custom_call.1} parent=11 // pred_check_branch
          %243 = sbr.rel (%p241) target = $region36
        $region35: #{tpu_custom_call.1} parent=11 // pred_region
          _
        $region36: #{tpu_custom_call.1} parent=11 // pred_fallthru
          _
      $region12: #{tpu_custom_call.1} parent=5 // pred_fallthru
        _
      %p244 = scmp.lt.s32.totalorder %s15, 2
      // Predicated region
      $region37: #{tpu_custom_call.1} parent=5 // pred_check
        %p245 = pneg %p244
      $region38: #{tpu_custom_call.1} parent=5 // pred_check_branch
        %247 = sbr.rel (%p245) target = $region40
      $region39: #{tpu_custom_call.1} parent=5 // pred_region
        // Predicated region
        $region41: #{tpu_custom_call.1} parent=39 // pred_check
          %p248 = pneg %p35
        $region42: #{tpu_custom_call.1} parent=39 // pred_check_branch
          %250 = sbr.rel (%p248) target = $region44
        $region43: #{tpu_custom_call.1} parent=39 // pred_region
          %s251 = smul.u32 2, %s15
          %p252 = scmp.lt.s32.totalorder %s251, 3
          %s253 = scalar_select %p252, %s251, 3
          %s254 = smul.addr %s253, 4
          %s255 = scalar_lea.vmem %s0, %s254
          %s256 = smul.u32 2, %s15
        $region44: #{tpu_custom_call.1} parent=39 // pred_fallthru
          _
      $region40: #{tpu_custom_call.1} parent=5 // pred_fallthru
        _
      %p257 = scmp.le.s32.totalorder 1, %s15
      %p258 = scmp.lt.s32.totalorder %s15, 3
      %p259 = pnand %p257, %p258
      %p260 = pneg %p259
      // Predicated region
      $region45: #{tpu_custom_call.1} parent=5 // pred_check
        _
      $region46: #{tpu_custom_call.1} parent=5 // pred_check_branch
        %262 = sbr.rel (%p259) target = $region48
      $region47: #{tpu_custom_call.1} parent=5 // pred_region
        %s263 = ssub.s32 %s15, 1
        // Predicated region
        $region49: #{tpu_custom_call.1} parent=47 // pred_check
          %p264 = pneg %p62
        $region50: #{tpu_custom_call.1} parent=47 // pred_check_branch
          %266 = sbr.rel (%p264) target = $region52
        $region51: #{tpu_custom_call.1} parent=47 // pred_region
          %267 = dma.done [#allocation3], 256
        $region52: #{tpu_custom_call.1} parent=47 // pred_fallthru
          _
        // Predicated region
        $region53: #{tpu_custom_call.1} parent=47 // pred_check
          %p268 = pneg %p83
        $region54: #{tpu_custom_call.1} parent=47 // pred_check_branch
          %270 = sbr.rel (%p268) target = $region56
        $region55: #{tpu_custom_call.1} parent=47 // pred_region
          %271 = dma.done [#allocation5], 16
        $region56: #{tpu_custom_call.1} parent=47 // pred_fallthru
          _
        %s272 = smul.u32 2, %s20
        %p273 = scmp.lt.s32.totalorder %s272, 3
        %s274 = scalar_select %p273, %s272, 3
        %s275 = smul.addr %s274, 4
        %s276 = scalar_lea.vmem %s0, %s275
        %p277 = pneg %p41
        %p278 = pneg %p38
        %p279 = pneg %p62
        %p280 = pneg %p59
        %p281 = pneg %p83
        %p282 = pneg %p80
        %p283 = pneg %p104
        %p284 = pneg %p101
        %p285 = pneg %p125
        %p286 = pneg %p122
        %p287 = pneg %p146
        %p288 = pneg %p143
        %p289 = pneg %p167
        %p290 = pneg %p164
        %p291 = pneg %p193
        %p292 = pneg %p190
        %s293 = smul.u32 2, %s20
        %p294 = scmp.lt.s32.totalorder %s293, 3
        %s295 = scalar_select %p294, %s293, 3
        %s296 = smul.addr %s295, 8
        %s297 = scalar_lea.vmem %s7, %s296
        %s298 = smul.u32 2, %s20
        %p299 = scmp.lt.s32.totalorder %s298, 3
        %s300 = scalar_select %p299, %s298, 3
        %s301 = smul.addr %s300, 4
        %s302 = scalar_lea.vmem %s0, %s301
        %s303 = smul.u32 2, %s20
        %s304 = smul.u32 2, %s20
        %p305 = scmp.lt.s32.totalorder %s304, 3
        %s306 = scalar_select %p305, %s304, 3
        %s307 = smul.addr %s306, 8
        %s308 = scalar_lea.vmem %s7, %s307
        %s309 = smul.u32 2, %s20
        %v311 = vld [vmem:[%s302] sm:$0xf]
        %v312 = vld [vmem:[%s302 + $0x4] sm:$0xf]
        %v313 = vld [vmem:[#allocation2] sm:$0xf]
        %v314 = vld [vmem:[#allocation2 + $0x4] sm:$0xf]
        %v315 = vld [vmem:[#allocation2 + $0x8] sm:$0xf]
        %v316 = vld [vmem:[#allocation2 + $0xc] sm:$0xf]
        %v317 = vld [vmem:[#allocation4] sm:$0x1]
        %v319 = vlaneseq
        %v320 = vshrl.u32 %v319, 7
        %v321 = vsub.s32 0, %v320
        %v322 = vrot.slane %v317, %v321
        %v326 = vunpack.c.l.b16 %v311
        %v327 = vunpack.c.l.b16 %v312
        %v328 = vpack.c.b16 %v327, %v326
        %v333 = vunpack.c.l.b16 %v313
        %v334 = vunpack.c.l.b16 %v314
        %v335 = vunpack.c.l.b16 %v315
        %v336 = vunpack.c.l.b16 %v316
        %v337 = vpack.c.b16 %v334, %v333
        %v338 = vpack.c.b16 %v336, %v335
        %vm341 = vcmask 261120
        %v343 = vsel %vm341, %v328, 0
        %345 = vmatprep.subr.bf16.mxu0 0
        %346 = vmatpush1.bf16.msra.mxu0 %v337
        %347 = vmatprep.subr.bf16.mxu0 0
        %348 = vmatpush1.bf16.msra.mxu0 %v338
        %349 = vmatprep.subr.bf16.mxu0 0
        %350 = vmatpush1.bf16.msra.mxu0 0
        %351 = vmatprep.subr.bf16.mxu0 0
        %352 = vmatpush1.bf16.msra.mxu0 0
        %353 = vmatprep.subr.bf16.mxu0 0
        %354 = vmatpush1.bf16.msra.mxu0 0
        %355 = vmatprep.subr.bf16.mxu0 0
        %356 = vmatpush1.bf16.msra.mxu0 0
        %357 = vmatprep.subr.bf16.mxu0 0
        %358 = vmatpush1.bf16.msra.mxu0 0
        %359 = vmatprep.subr.bf16.mxu0 0
        %360 = vmatpush1.bf16.msra.mxu0 0
        %361 = vmatprep.subr.bf16.mxu0 0
        %362 = vmatpush1.bf16.msra.mxu0 0
        %363 = vmatprep.subr.bf16.mxu0 0
        %364 = vmatpush1.bf16.msra.mxu0 0
        %365 = vmatprep.subr.bf16.mxu0 0
        %366 = vmatpush1.bf16.msra.mxu0 0
        %367 = vmatprep.subr.bf16.mxu0 0
        %368 = vmatpush1.bf16.msra.mxu0 0
        %369 = vmatprep.subr.bf16.mxu0 0
        %370 = vmatpush1.bf16.msra.mxu0 0
        %371 = vmatprep.subr.bf16.mxu0 0
        %372 = vmatpush1.bf16.msra.mxu0 0
        %373 = vmatprep.subr.bf16.mxu0 0
        %374 = vmatpush1.bf16.msra.mxu0 0
        %375 = vmatprep.subr.bf16.mxu0 0
        %376 = vmatpush1.bf16.msra.mxu0 0
        %377 = vmatprep.mubr.bf16.mxu0 0
        %378 = vmatmul.mubr.bf16.gmra.mrb[0].mxu0 %v343
        %v379 = vpop.f32.mrb[0].mxu0
        %v380 = vadd.f32 %v322, %v379
        %v381 = vpop.f32.mrb[0].mxu0
        %v382 = vpop.f32.mrb[0].mxu0
        %v383 = vadd.f32 %v322, %v382
        %v384 = vpop.f32.mrb[0].mxu0
        %385 = vdwg.mxu0
        %v386 = vmax.f32 %v380, 0.0
        %v387 = vmax.f32 %v383, 0.0
        %v388 = vpack.c.bf16 %v387, %v386
        %v389 = vld [vmem:[%s3] sm:$0xff]
        %v390 = vld [vmem:[%s3 + $0x8] sm:$0xff]
        %v391 = vld [vmem:[%s3 + $0x10] sm:$0xff]
        %v392 = vld [vmem:[%s3 + $0x18] sm:$0xff]
        %v393 = vld [vmem:[%s3 + $0x20] sm:$0xff]
        %v394 = vld [vmem:[%s3 + $0x28] sm:$0xff]
        %v395 = vld [vmem:[%s3 + $0x30] sm:$0xff]
        %v396 = vld [vmem:[%s3 + $0x38] sm:$0xff]
        %v397 = vld [vmem:[%s3 + $0x40] sm:$0xff]
        %v398 = vld [vmem:[%s3 + $0x48] sm:$0xff]
        %v399 = vld [vmem:[%s3 + $0x50] sm:$0xff]
        %v400 = vld [vmem:[%s3 + $0x58] sm:$0xff]
        %v401 = vld [vmem:[%s3 + $0x60] sm:$0xff]
        %v402 = vld [vmem:[%s3 + $0x68] sm:$0xff]
        %v403 = vld [vmem:[%s3 + $0x70] sm:$0xff]
        %v404 = vld [vmem:[%s3 + $0x78] sm:$0xff]
        %v405 = vld [vmem:[%s4] sm:$0x3]
        %v407 = vlaneseq
        %v408 = vshrl.u32 %v407, 7
        %v409 = vsub.s32 0, %v408
        %v410 = vrot.slane %v405, %v409
        %v411 = vlaneseq
        %v412 = vshrl.u32 %v411, 7
        %v413 = vsub.s32 1, %v412
        %v414 = vrot.slane %v405, %v413
        %v433 = vunpack.c.l.b16 %v389
        %v434 = vunpack.c.h.b16 %v389
        %v435 = vunpack.c.l.b16 %v390
        %v436 = vunpack.c.h.b16 %v390
        %v437 = vunpack.c.l.b16 %v391
        %v438 = vunpack.c.h.b16 %v391
        %v439 = vunpack.c.l.b16 %v392
        %v440 = vunpack.c.h.b16 %v392
        %v441 = vunpack.c.l.b16 %v393
        %v442 = vunpack.c.h.b16 %v393
        %v443 = vunpack.c.l.b16 %v394
        %v444 = vunpack.c.h.b16 %v394
        %v445 = vunpack.c.l.b16 %v395
        %v446 = vunpack.c.h.b16 %v395
        %v447 = vunpack.c.l.b16 %v396
        %v448 = vunpack.c.h.b16 %v396
        %v449 = vunpack.c.l.b16 %v397
        %v450 = vunpack.c.h.b16 %v397
        %v451 = vunpack.c.l.b16 %v398
        %v452 = vunpack.c.h.b16 %v398
        %v453 = vunpack.c.l.b16 %v399
        %v454 = vunpack.c.h.b16 %v399
        %v455 = vunpack.c.l.b16 %v400
        %v456 = vunpack.c.h.b16 %v400
        %v457 = vunpack.c.l.b16 %v401
        %v458 = vunpack.c.h.b16 %v401
        %v459 = vunpack.c.l.b16 %v402
        %v460 = vunpack.c.h.b16 %v402
        %v461 = vunpack.c.l.b16 %v403
        %v462 = vunpack.c.h.b16 %v403
        %v463 = vunpack.c.l.b16 %v404
        %v464 = vunpack.c.h.b16 %v404
        %v465 = vpack.c.b16 %v435, %v433
        %v466 = vpack.c.b16 %v436, %v434
        %v467 = vpack.c.b16 %v439, %v437
        %v468 = vpack.c.b16 %v440, %v438
        %v469 = vpack.c.b16 %v443, %v441
        %v470 = vpack.c.b16 %v444, %v442
        %v471 = vpack.c.b16 %v447, %v445
        %v472 = vpack.c.b16 %v448, %v446
        %v473 = vpack.c.b16 %v451, %v449
        %v474 = vpack.c.b16 %v452, %v450
        %v475 = vpack.c.b16 %v455, %v453
        %v476 = vpack.c.b16 %v456, %v454
        %v477 = vpack.c.b16 %v459, %v457
        %v478 = vpack.c.b16 %v460, %v458
        %v479 = vpack.c.b16 %v463, %v461
        %v480 = vpack.c.b16 %v464, %v462
        %497 = vmatprep.subr.bf16.mxu0 %v466
        %498 = vmatpush1.bf16.msra.mxu0 %v465
        %499 = vmatprep.subr.bf16.mxu0 %v468
        %500 = vmatpush1.bf16.msra.mxu0 %v467
        %501 = vmatprep.subr.bf16.mxu0 %v470
        %502 = vmatpush1.bf16.msra.mxu0 %v469
        %503 = vmatprep.subr.bf16.mxu0 %v472
        %504 = vmatpush1.bf16.msra.mxu0 %v471
        %505 = vmatprep.subr.bf16.mxu0 %v474
        %506 = vmatpush1.bf16.msra.mxu0 %v473
        %507 = vmatprep.subr.bf16.mxu0 %v476
        %508 = vmatpush1.bf16.msra.mxu0 %v475
        %509 = vmatprep.subr.bf16.mxu0 %v478
        %510 = vmatpush1.bf16.msra.mxu0 %v477
        %511 = vmatprep.subr.bf16.mxu0 %v480
        %512 = vmatpush1.bf16.msra.mxu0 %v479
        %513 = vmatprep.subr.bf16.mxu0 0
        %514 = vmatpush1.bf16.msra.mxu0 0
        %515 = vmatprep.subr.bf16.mxu0 0
        %516 = vmatpush1.bf16.msra.mxu0 0
        %517 = vmatprep.subr.bf16.mxu0 0
        %518 = vmatpush1.bf16.msra.mxu0 0
        %519 = vmatprep.subr.bf16.mxu0 0
        %520 = vmatpush1.bf16.msra.mxu0 0
        %521 = vmatprep.subr.bf16.mxu0 0
        %522 = vmatpush1.bf16.msra.mxu0 0
        %523 = vmatprep.subr.bf16.mxu0 0
        %524 = vmatpush1.bf16.msra.mxu0 0
        %525 = vmatprep.subr.bf16.mxu0 0
        %526 = vmatpush1.bf16.msra.mxu0 0
        %527 = vmatprep.subr.bf16.mxu0 0
        %528 = vmatpush1.bf16.msra.mxu0 0
        %529 = vmatprep.mubr.bf16.mxu0 0
        %530 = vmatmul.mubr.bf16.gmra.mrb[0].mxu0 %v388
        %v531 = vpop.f32.mrb[0].mxu0
        %v532 = vadd.f32 %v410, %v531
        %v533 = vpop.f32.mrb[0].mxu0
        %v534 = vadd.f32 %v414, %v533
        %v535 = vpop.f32.mrb[0].mxu0
        %v536 = vadd.f32 %v410, %v535
        %v537 = vpop.f32.mrb[0].mxu0
        %v538 = vadd.f32 %v414, %v537
        %539 = vdwg.mxu0
        %v540 = vmax.f32 %v532, 0.0
        %v541 = vmax.f32 %v534, 0.0
        %v542 = vmax.f32 %v536, 0.0
        %v543 = vmax.f32 %v538, 0.0
        %v544 = vpack.c.bf16 %v542, %v540
        %v545 = vpack.c.bf16 %v543, %v541
        %v546 = vld [vmem:[%s5] sm:$0xf]
        %v547 = vld [vmem:[%s5 + $0x4] sm:$0xf]
        %v548 = vld [vmem:[%s5 + $0x8] sm:$0xf]
        %v549 = vld [vmem:[%s5 + $0xc] sm:$0xf]
        %v550 = vld [vmem:[%s5 + $0x10] sm:$0xf]
        %v551 = vld [vmem:[%s5 + $0x14] sm:$0xf]
        %v552 = vld [vmem:[%s5 + $0x18] sm:$0xf]
        %v553 = vld [vmem:[%s5 + $0x1c] sm:$0xf]
        %v554 = vld [vmem:[%s5 + $0x20] sm:$0xf]
        %v555 = vld [vmem:[%s5 + $0x24] sm:$0xf]
        %v556 = vld [vmem:[%s5 + $0x28] sm:$0xf]
        %v557 = vld [vmem:[%s5 + $0x2c] sm:$0xf]
        %v558 = vld [vmem:[%s5 + $0x30] sm:$0xf]
        %v559 = vld [vmem:[%s5 + $0x34] sm:$0xf]
        %v560 = vld [vmem:[%s5 + $0x38] sm:$0xf]
        %v561 = vld [vmem:[%s5 + $0x3c] sm:$0xf]
        %v562 = vld [vmem:[%s5 + $0x40] sm:$0xf]
        %v563 = vld [vmem:[%s5 + $0x44] sm:$0xf]
        %v564 = vld [vmem:[%s5 + $0x48] sm:$0xf]
        %v565 = vld [vmem:[%s5 + $0x4c] sm:$0xf]
        %v566 = vld [vmem:[%s5 + $0x50] sm:$0xf]
        %v567 = vld [vmem:[%s5 + $0x54] sm:$0xf]
        %v568 = vld [vmem:[%s5 + $0x58] sm:$0xf]
        %v569 = vld [vmem:[%s5 + $0x5c] sm:$0xf]
        %v570 = vld [vmem:[%s5 + $0x60] sm:$0xf]
        %v571 = vld [vmem:[%s5 + $0x64] sm:$0xf]
        %v572 = vld [vmem:[%s5 + $0x68] sm:$0xf]
        %v573 = vld [vmem:[%s5 + $0x6c] sm:$0xf]
        %v574 = vld [vmem:[%s5 + $0x70] sm:$0xf]
        %v575 = vld [vmem:[%s5 + $0x74] sm:$0xf]
        %v576 = vld [vmem:[%s5 + $0x78] sm:$0xf]
        %v577 = vld [vmem:[%s5 + $0x7c] sm:$0xf]
        %v578 = vld [vmem:[%s6] sm:$0x1]
        %v580 = vlaneseq
        %v581 = vshrl.u32 %v580, 7
        %v582 = vsub.s32 0, %v581
        %v583 = vrot.slane %v578, %v582
        %v617 = vunpack.c.l.b16 %v546
        %v618 = vunpack.c.l.b16 %v547
        %v619 = vunpack.c.l.b16 %v548
        %v620 = vunpack.c.l.b16 %v549
        %v621 = vunpack.c.l.b16 %v550
        %v622 = vunpack.c.l.b16 %v551
        %v623 = vunpack.c.l.b16 %v552
        %v624 = vunpack.c.l.b16 %v553
        %v625 = vunpack.c.l.b16 %v554
        %v626 = vunpack.c.l.b16 %v555
        %v627 = vunpack.c.l.b16 %v556
        %v628 = vunpack.c.l.b16 %v557
        %v629 = vunpack.c.l.b16 %v558
        %v630 = vunpack.c.l.b16 %v559
        %v631 = vunpack.c.l.b16 %v560
        %v632 = vunpack.c.l.b16 %v561
        %v633 = vunpack.c.l.b16 %v562
        %v634 = vunpack.c.l.b16 %v563
        %v635 = vunpack.c.l.b16 %v564
        %v636 = vunpack.c.l.b16 %v565
        %v637 = vunpack.c.l.b16 %v566
        %v638 = vunpack.c.l.b16 %v567
        %v639 = vunpack.c.l.b16 %v568
        %v640 = vunpack.c.l.b16 %v569
        %v641 = vunpack.c.l.b16 %v570
        %v642 = vunpack.c.l.b16 %v571
        %v643 = vunpack.c.l.b16 %v572
        %v644 = vunpack.c.l.b16 %v573
        %v645 = vunpack.c.l.b16 %v574
        %v646 = vunpack.c.l.b16 %v575
        %v647 = vunpack.c.l.b16 %v576
        %v648 = vunpack.c.l.b16 %v577
        %v649 = vpack.c.b16 %v618, %v617
        %v650 = vpack.c.b16 %v620, %v619
        %v651 = vpack.c.b16 %v622, %v621
        %v652 = vpack.c.b16 %v624, %v623
        %v653 = vpack.c.b16 %v626, %v625
        %v654 = vpack.c.b16 %v628, %v627
        %v655 = vpack.c.b16 %v630, %v629
        %v656 = vpack.c.b16 %v632, %v631
        %v657 = vpack.c.b16 %v634, %v633
        %v658 = vpack.c.b16 %v636, %v635
        %v659 = vpack.c.b16 %v638, %v637
        %v660 = vpack.c.b16 %v640, %v639
        %v661 = vpack.c.b16 %v642, %v641
        %v662 = vpack.c.b16 %v644, %v643
        %v663 = vpack.c.b16 %v646, %v645
        %v664 = vpack.c.b16 %v648, %v647
        %681 = vmatprep.subr.bf16.mxu0 0
        %682 = vmatpush1.bf16.msra.mxu0 %v649
        %683 = vmatprep.subr.bf16.mxu0 0
        %684 = vmatpush1.bf16.msra.mxu0 %v650
        %685 = vmatprep.subr.bf16.mxu0 0
        %686 = vmatpush1.bf16.msra.mxu0 %v651
        %687 = vmatprep.subr.bf16.mxu0 0
        %688 = vmatpush1.bf16.msra.mxu0 %v652
        %689 = vmatprep.subr.bf16.mxu0 0
        %690 = vmatpush1.bf16.msra.mxu0 %v653
        %691 = vmatprep.subr.bf16.mxu0 0
        %692 = vmatpush1.bf16.msra.mxu0 %v654
        %693 = vmatprep.subr.bf16.mxu0 0
        %694 = vmatpush1.bf16.msra.mxu0 %v655
        %695 = vmatprep.subr.bf16.mxu0 0
        %696 = vmatpush1.bf16.msra.mxu0 %v656
        %697 = vmatprep.subr.bf16.mxu0 0
        %698 = vmatpush1.bf16.msra.mxu0 %v657
        %699 = vmatprep.subr.bf16.mxu0 0
        %700 = vmatpush1.bf16.msra.mxu0 %v658
        %701 = vmatprep.subr.bf16.mxu0 0
        %702 = vmatpush1.bf16.msra.mxu0 %v659
        %703 = vmatprep.subr.bf16.mxu0 0
        %704 = vmatpush1.bf16.msra.mxu0 %v660
        %705 = vmatprep.subr.bf16.mxu0 0
        %706 = vmatpush1.bf16.msra.mxu0 %v661
        %707 = vmatprep.subr.bf16.mxu0 0
        %708 = vmatpush1.bf16.msra.mxu0 %v662
        %709 = vmatprep.subr.bf16.mxu0 0
        %710 = vmatpush1.bf16.msra.mxu0 %v663
        %711 = vmatprep.subr.bf16.mxu0 0
        %712 = vmatpush1.bf16.msra.mxu0 %v664
        %713 = vmatprep.mubr.bf16.mxu0 %v545
        %714 = vmatmul.mubr.bf16.gmra.mrb[0].mxu0 %v544
        %v715 = vpop.f32.mrb[0].mxu0
        %v716 = vadd.f32 %v583, %v715
        %v717 = vpop.f32.mrb[0].mxu0
        %v718 = vpop.f32.mrb[0].mxu0
        %v719 = vadd.f32 %v583, %v718
        %v720 = vpop.f32.mrb[0].mxu0
        %721 = vdwg.mxu0
        %v722 = vtanh.pop %v716
        %v723 = vtanh.pop %v719
        %vm724 = vcmask 130048
        %725 = vst.msk [vmem:[%s308] sm:$0xff] %vm724, %v722
        %726 = vst.msk [vmem:[%s308 + $0x8] sm:$0xff] %vm724, %v723
        %s727 = smul.u32 2, %s20
        %p728 = scmp.lt.s32.totalorder %s727, 3
        %s729 = scalar_select %p728, %s727, 3
        %s730 = smul.addr %s729, 8
        %s731 = scalar_lea.vmem %s7, %s730
        // Predicated region
        $region57: #{tpu_custom_call.1} parent=47 // pred_check
          %p732 = pneg %p190
        $region58: #{tpu_custom_call.1} parent=47 // pred_check_branch
          %734 = sbr.rel (%p732) target = $region60
        $region59: #{tpu_custom_call.1} parent=47 // pred_region
          %s735 = smul.u32 2, %s20
        $region60: #{tpu_custom_call.1} parent=47 // pred_fallthru
          _
      $region48: #{tpu_custom_call.1} parent=5 // pred_fallthru
        _
      %p736 = scmp.le.s32.totalorder 2, %s15
      // Predicated region
      $region61: #{tpu_custom_call.1} parent=5 // pred_check
        %p737 = pneg %p736
      $region62: #{tpu_custom_call.1} parent=5 // pred_check_branch
        %739 = sbr.rel (%p737) target = $region64
      $region63: #{tpu_custom_call.1} parent=5 // pred_region
        %s740 = ssub.s32 %s15, 2
        // Predicated region
        $region65: #{tpu_custom_call.1} parent=63 // pred_check
          %p741 = pneg %p196
        $region66: #{tpu_custom_call.1} parent=63 // pred_check_branch
          %743 = sbr.rel (%p741) target = $region68
        $region67: #{tpu_custom_call.1} parent=63 // pred_region
          %s744 = smul.u32 2, %s21
          %p745 = scmp.lt.s32.totalorder %s744, 3
          %s746 = scalar_select %p745, %s744, 3
          %s747 = smul.addr %s746, 8
          %s748 = scalar_lea.vmem %s7, %s747
        $region68: #{tpu_custom_call.1} parent=63 // pred_fallthru
          _
      $region64: #{tpu_custom_call.1} parent=5 // pred_fallthru
        _
    $region6: #{tpu_custom_call.1} parent=1 // loop_footer
      %s19 = sadd.s32 1, %s15
    $region7: #{tpu_custom_call.1} parent=1 // loop_footer_branch
      %14 = sbr.rel target = $region3
    $region8: #{tpu_custom_call.1} parent=1 // loop_exit
      _
    %749 = vsyncpa [#allocation3], 1
    %s750 = scalar_lea.sflag [#allocation3], 1
    %751 = vsyncpa %s750, 1
    %752 = vsyncpa [#allocation5], 1

</llo_original>
